<compile_context>
chip_gen: v7x
topology: tpu7x:2x2x1
jax: 0.10.0
libtpu: 0.0.40
codegen_flags: <defaults>
</compile_context>

<pallas_src>
import math

import jax
import jax.numpy as jnp
from jax.experimental import pallas as pl
from jax.experimental.pallas import tpu as pltpu


# Per-step VMEM budget used to size the lane tile: 2x double-buffered
# (inputs + output) tiles must stay comfortably inside v7x's scoped VMEM.
_VMEM_TILE_BUDGET = 8 * 1024 * 1024


class TensorType:
    """Type of a 2D tensor (JAX mirror of the torch version)."""

    def __init__(self, num_channels, spatial_shape, complex):
        self.num_channels = num_channels
        self.spatial_shape = tuple(spatial_shape)
        self.complex = complex
        self.dtype = jnp.complex64 if self.complex else jnp.float32

    def __repr__(self):
        return (f'TensorType(num_channels={self.num_channels}, '
                f'spatial_shape={self.spatial_shape}, complex={self.complex})')


class SplitTensorType:
    """Type of a 2D split tensor (JAX mirror of the torch version)."""

    def __init__(self, groups, spatial_shape, complex):
        self.groups = dict(groups)
        self.keys = list(sorted(self.groups.keys()))
        self.num_channels = sum(self.groups.values())
        self.spatial_shape = tuple(spatial_shape)
        self.complex = complex
        self.dtype = jnp.complex64 if self.complex else jnp.float32

    def tensor_type(self):
        return TensorType(self.num_channels, self.spatial_shape, self.complex)

    def __repr__(self):
        return (f'SplitTensorType(groups={self.groups}, '
                f'spatial_shape={self.spatial_shape}, complex={self.complex})')


def _pick_lane_tile(lanes, c_total, itemsize):
    """Largest lane tile that divides `lanes`, is a multiple of 128 (or the full
    dim if `lanes` isn't 128-aligned) and keeps pipelined tiles within budget."""
    if lanes % 128 != 0:
        return lanes  # full-dim block: exempt from the (8, 128) divisibility rule
    max_t = max(128, _VMEM_TILE_BUDGET // (4 * c_total * itemsize))
    t = min(lanes, (max_t // 128) * 128)
    while lanes % t != 0:
        t -= 128
    return t


def _make_concat_kernel(starts, sizes):
    def kernel(*refs):
        *in_refs, out_ref = refs
        # Static channel offsets -> plain VMEM tile copies into the output slab.
        for ref, st, c in zip(in_refs, starts, sizes):
            out_ref[:, st:st + c, :] = ref[...]
    return kernel


def _channel_concat(tensors):
    """Concatenate (B, C_k, *spatial) tensors along channels via a Pallas copy."""
    assert len(tensors) >= 1
    if len(tensors) == 1:
        return tensors[0]

    B = tensors[0].shape[0]
    spatial = tensors[0].shape[2:]
    dtype = tensors[0].dtype
    for t in tensors:
        assert t.shape[0] == B and t.shape[2:] == spatial and t.dtype == dtype

    c_list = [t.shape[1] for t in tensors]
    C_total = sum(c_list)
    S = math.prod(spatial)

    # Lane-dense view: fold all spatial dims into the minor-most axis.
    # Complex inputs are viewed as float32 with doubled lane width (wrapper-only
    # bitcast, no data movement); the kernel just copies raw bits.
    # TODO(synk): complex64 groups use this bitcast path but aren't exercised below.
    is_complex = jnp.issubdtype(dtype, jnp.complexfloating)
    if is_complex:
        work = [jax.lax.bitcast_convert_type(t, jnp.float32).reshape(B, c, 2 * S)
                for t, c in zip(tensors, c_list)]
        lanes, work_dtype = 2 * S, jnp.float32
    else:
        work = [t.reshape(B, c, S) for t, c in zip(tensors, c_list)]
        lanes, work_dtype = S, dtype

    itemsize = jnp.dtype(work_dtype).itemsize
    T = _pick_lane_tile(lanes, C_total, itemsize)
    n_s = lanes // T

    # Fold the whole batch into one block when per-step slabs would otherwise be
    # tiny (grid-step overhead ~0.35us would dominate); keep batch in the grid
    # when slabs are already large so v7x can shard steps across its 2 TCs.
    per_batch_step_bytes = C_total * T * itemsize
    small = (per_batch_step_bytes < 512 * 1024 and
             4 * B * per_batch_step_bytes <= _VMEM_TILE_BUDGET)
    TB = B if small else 1
    n_b = B // TB

    starts = []
    off = 0
    for c in c_list:
        starts.append(off)
        off += c

    in_specs = [pl.BlockSpec((TB, c, T), lambda b, s: (b, 0, s)) for c in c_list]
    out_spec = pl.BlockSpec((TB, C_total, T), lambda b, s: (b, 0, s))

    out = pl.pallas_call(
        _make_concat_kernel(starts, c_list),
        out_shape=jax.ShapeDtypeStruct((B, C_total, lanes), work_dtype),
        grid=(n_b, n_s),
        in_specs=in_specs,
        out_specs=out_spec,
        compiler_params=pltpu.CompilerParams(
            dimension_semantics=("parallel", "parallel")),
        cost_estimate=pl.CostEstimate(
            flops=0, transcendentals=0,
            bytes_accessed=2 * B * C_total * lanes * itemsize),
    )(*work)

    if is_complex:
        out = jax.lax.bitcast_convert_type(out.reshape(B, C_total, S, 2), dtype)
    return out.reshape((B, C_total) + tuple(spatial))


class SplitTensor:
    """Tensor whose channels are naturally split in groups (JAX mirror)."""

    def __init__(self, x, groups=None):
        if groups is not None:
            assert isinstance(x, jax.Array)
            if sum(groups.values()) != x.shape[1]:
                raise ValueError(f'Got groups {groups} for tensor of shape {x.shape}')
            self.full = x
            self.split = None
            self.num_channels = dict(groups)
        else:
            self.full = None
            self.split = dict(x)
            self.num_channels = {key: xk.shape[1] for key, xk in self.split.items()}
        self.keys = list(self.num_channels.keys())
        self.start = {}
        self.end = {}
        num_channels = 0
        for key in self.keys:
            prev = num_channels
            num_channels += self.num_channels[key]
            self.start[key] = prev
            self.end[key] = num_channels

    def full_view(self):
        if self.full is None:
            self.full = _channel_concat([self.split[key] for key in self.keys])
        return self.full

    def diag_view(self):
        if self.split is None:
            self.split = {key: self.full[:, self.start[key]:self.end[key]]
                          for key in self.keys}
        return self.split

    def triang_view(self):
        x = self.full_view()
        return {key: x[:, :self.end[key]] for key in self.keys}


class ToTensor:
    """ToTensor module: forward returns the full (channel-concatenated) view."""

    def __init__(self, input_type: SplitTensorType):
        self.input_type = input_type
        self.output_type = TensorType(sum(self.input_type.groups.values()),
                                      self.input_type.spatial_shape,
                                      self.input_type.complex)

    def __call__(self, x: SplitTensor) -> jax.Array:
        return x.full_view()


if __name__ == "__main__":
    key = jax.random.PRNGKey(0)

    B, H, W = 2, 16, 16
    groups = {"a": 1, "b": 2, "c": 1}   # 4 channels total

    split_type = SplitTensorType(groups, (H, W), complex=False)
    to_tensor = ToTensor(split_type)

    split = {}
    for name in split_type.keys:
        key, sub = jax.random.split(key)
        split[name] = jax.random.normal(sub, (B, groups[name], H, W),
                                        dtype=jnp.float32)

    x = SplitTensor(split)
    out = to_tensor(x)
    out = jax.block_until_ready(out)

    # Reference: torch.cat along channel dim == jnp.concatenate(axis=1).
    ref = jnp.concatenate([split[k] for k in x.keys], axis=1)
    assert out.shape == (B, split_type.num_channels, H, W)
    assert out.dtype == ref.dtype
    assert jnp.array_equal(out, ref)

    # Already-full path: full_view() returns the stored tensor without a copy.
    y = SplitTensor(ref, groups=groups)
    out_full = to_tensor(y)
    assert out_full is ref

    print("KERNEL_OK")
</pallas_src>

<mosaic_0001>
module attributes {stable_mosaic.version = 11 : i64} {
  func.func @kernel(%arg0: i32, %arg1: i32, %arg2: memref<2x1x256xf32, #tpu.memory_space<vmem>>, %arg3: memref<2x2x256xf32, #tpu.memory_space<vmem>>, %arg4: memref<2x1x256xf32, #tpu.memory_space<vmem>>, %arg5: memref<2x4x256xf32, #tpu.memory_space<vmem>>) attributes {dimension_semantics = [#tpu.dimension_semantics<parallel>, #tpu.dimension_semantics<parallel>], iteration_bounds = array<i64: 1, 1>, scalar_prefetch = 0 : i64, scratch_operands = 0 : i64, tpu.core_type = #tpu.core_type<tc>, window_params = [{transform_indices = @transform_0, window_bounds = array<i64: 2, 1, 256>}, {transform_indices = @transform_1, window_bounds = array<i64: 2, 2, 256>}, {transform_indices = @transform_2, window_bounds = array<i64: 2, 1, 256>}, {transform_indices = @transform_3, window_bounds = array<i64: 2, 4, 256>}]} {
    %c0 = arith.constant 0 : index
    %c0_0 = arith.constant 0 : index
    %c0_1 = arith.constant 0 : index
    %0 = vector.load %arg2[%c0, %c0_0, %c0_1] : memref<2x1x256xf32, #tpu.memory_space<vmem>>, vector<2x1x256xf32>
    %c0_2 = arith.constant 0 : index
    %c0_3 = arith.constant 0 : index
    %c0_4 = arith.constant 0 : index
    %1 = vector.load %arg5[%c0_2, %c0_3, %c0_4] : memref<2x4x256xf32, #tpu.memory_space<vmem>>, vector<2x1x256xf32>
    tpu.vector_store %arg5[%c0_2, %c0_3, %c0_4], %0 {strides = array<i32>} : memref<2x4x256xf32, #tpu.memory_space<vmem>>, vector<2x1x256xf32>,
    %c0_5 = arith.constant 0 : index
    %c0_6 = arith.constant 0 : index
    %c0_7 = arith.constant 0 : index
    %2 = vector.load %arg3[%c0_5, %c0_6, %c0_7] : memref<2x2x256xf32, #tpu.memory_space<vmem>>, vector<2x2x256xf32>
    %c0_8 = arith.constant 0 : index
    %c1 = arith.constant 1 : index
    %c0_9 = arith.constant 0 : index
    %3 = vector.load %arg5[%c0_8, %c1, %c0_9] : memref<2x4x256xf32, #tpu.memory_space<vmem>>, vector<2x2x256xf32>
    tpu.vector_store %arg5[%c0_8, %c1, %c0_9], %2 {strides = array<i32>} : memref<2x4x256xf32, #tpu.memory_space<vmem>>, vector<2x2x256xf32>,
    %c0_10 = arith.constant 0 : index
    %c0_11 = arith.constant 0 : index
    %c0_12 = arith.constant 0 : index
    %4 = vector.load %arg4[%c0_10, %c0_11, %c0_12] : memref<2x1x256xf32, #tpu.memory_space<vmem>>, vector<2x1x256xf32>
    %c0_13 = arith.constant 0 : index
    %c3 = arith.constant 3 : index
    %c0_14 = arith.constant 0 : index
    %5 = vector.load %arg5[%c0_13, %c3, %c0_14] : memref<2x4x256xf32, #tpu.memory_space<vmem>>, vector<2x1x256xf32>
    tpu.vector_store %arg5[%c0_13, %c3, %c0_14], %4 {strides = array<i32>} : memref<2x4x256xf32, #tpu.memory_space<vmem>>, vector<2x1x256xf32>,
    return
  }
  func.func @transform_0(%arg0: i32, %arg1: i32) -> (i32, i32, i32) {
    %c0_i32 = arith.constant 0 : i32
    %c0_i32_0 = arith.constant 0 : i32
    return %arg0, %c0_i32, %arg1 : i32, i32, i32
  }
  func.func @transform_1(%arg0: i32, %arg1: i32) -> (i32, i32, i32) {
    %c0_i32 = arith.constant 0 : i32
    %c0_i32_0 = arith.constant 0 : i32
    return %arg0, %c0_i32, %arg1 : i32, i32, i32
  }
  func.func @transform_2(%arg0: i32, %arg1: i32) -> (i32, i32, i32) {
    %c0_i32 = arith.constant 0 : i32
    %c0_i32_0 = arith.constant 0 : i32
    return %arg0, %c0_i32, %arg1 : i32, i32, i32
  }
  func.func @transform_3(%arg0: i32, %arg1: i32) -> (i32, i32, i32) {
    %c0_i32 = arith.constant 0 : i32
    %c0_i32_0 = arith.constant 0 : i32
    return %arg0, %c0_i32, %arg1 : i32, i32, i32
  }
}

</mosaic_0001>

<llo_original>
// kernel: tpu_custom_call.1
$region0: #{tpu_custom_call.1}
  #allocation0 [shape = 'u32[]', space=smem, size = 0x4, offset = 0x4, fixed_abs, tag = 'smem constant byte address 0x4 - core index']
  #allocation1 [shape = 'u32[144,128]{1,0:T(1,128)}', space=vmem, size = 0x12000, scoped, tag = 'internal scratch']
  %s0 = inlined_call_operand.hbm [shape: f32[2,1,256], index: 0, kind: input, shape index: {}]
  %s1 = inlined_call_operand.hbm [shape: f32[2,2,256], index: 1, kind: input, shape index: {}]
  %s2 = inlined_call_operand.vmem [shape: f32[2,1,256], index: 2, kind: input, shape index: {}]
  %s3 = inlined_call_operand.hbm [shape: f32[2,4,256], index: 3, kind: output, shape index: {}]
  %s4 = sld [smem:[#allocation0]]
  $region30: #{tpu_custom_call.1} parent=0
    _
  %s6 = ssub.s32 1, %s4
  %s7 = scalar_select 0, %s6, %s4
  $region1: #{tpu_custom_call.1} parent=0
    #allocation2 [shape = 'u8[2048]{0}', space=vmem, size = 0x800, scoped, tag = 'input window, operand 0, single buffered']
    #allocation3 [shape = 's32[1]{0}', space=sflag, size = 0x4, scoped, tag = 'scoped memory for tpu_custom_call.1']
    #allocation4 [shape = 's32[1]{0}', space=sflag, size = 0x4, scoped, tag = 'scoped memory for tpu_custom_call.1']
    #allocation5 [shape = 'u8[4096]{0}', space=vmem, size = 0x1000, scoped, tag = 'input window, operand 1, single buffered']
    #allocation6 [shape = 's32[1]{0}', space=sflag, size = 0x4, scoped, tag = 'scoped memory for tpu_custom_call.1']
    #allocation7 [shape = 'u8[8192]{0}', space=vmem, size = 0x2000, scoped, tag = 'output window, operand 0, single buffered']
    %8 = vsyncpa [#allocation3], 0
    %9 = vsyncpa [#allocation6], 0
    %10 = vsyncpa [#allocation4], 0
    // Predicated region
    $region2: #{tpu_custom_call.1} parent=1 // pred_check
      _
    $region3: #{tpu_custom_call.1} parent=1 // pred_check_branch
      %12 = sbr.rel (0) target = $region5
    $region4: #{tpu_custom_call.1} parent=1 // pred_region
      %s14 = ssub.s32 64, 64
      %15 = vsyncadd [#allocation3], %s14
      %s16 = sshll.u32 [#allocation2], 4
      %s17 = int_to_ptr.vmem [resolvable:$true] %s16
      %22 = dma.hbm_to_vmem [thread:$0]  %s0, 64, %s17, [#allocation3], 32, 32, 2
    $region5: #{tpu_custom_call.1} parent=1 // pred_fallthru
      _
    // Predicated region
    $region6: #{tpu_custom_call.1} parent=1 // pred_check
      _
    $region7: #{tpu_custom_call.1} parent=1 // pred_check_branch
      %24 = sbr.rel (0) target = $region9
    $region8: #{tpu_custom_call.1} parent=1 // pred_region
      %s26 = ssub.s32 128, 128
      %27 = vsyncadd [#allocation6], %s26
      %s28 = sshll.u32 [#allocation5], 4
      %s29 = int_to_ptr.vmem [resolvable:$true] %s28
      %34 = dma.hbm_to_vmem [thread:$0]  %s1, 128, %s29, [#allocation6], 64, 64, 4
    $region9: #{tpu_custom_call.1} parent=1 // pred_fallthru
      _
    // Predicated region
    $region10: #{tpu_custom_call.1} parent=1 // pred_check
      _
    $region11: #{tpu_custom_call.1} parent=1 // pred_check_branch
      %36 = sbr.rel (0) target = $region13
    $region12: #{tpu_custom_call.1} parent=1 // pred_region
      _
    $region13: #{tpu_custom_call.1} parent=1 // pred_fallthru
      _
    // Predicated region
    $region14: #{tpu_custom_call.1} parent=1 // pred_check
      _
    $region15: #{tpu_custom_call.1} parent=1 // pred_check_branch
      %38 = sbr.rel (0) target = $region17
    $region16: #{tpu_custom_call.1} parent=1 // pred_region
      %39 = dma.done [#allocation3], 64
    $region17: #{tpu_custom_call.1} parent=1 // pred_fallthru
      _
    // Predicated region
    $region18: #{tpu_custom_call.1} parent=1 // pred_check
      _
    $region19: #{tpu_custom_call.1} parent=1 // pred_check_branch
      %41 = sbr.rel (0) target = $region21
    $region20: #{tpu_custom_call.1} parent=1 // pred_region
      %42 = dma.done [#allocation6], 128
    $region21: #{tpu_custom_call.1} parent=1 // pred_fallthru
      _
    %v43 = vld [vmem:[#allocation2] sm:$0x3]
    %v44 = vld [vmem:[#allocation2 + $0x2] sm:$0x3]
    %v45 = vlaneseq
    %vm46 = vcmp.ge.s32.totalorder %v45, 0
    %vm47 = vcmp.lt.s32.totalorder %v45, 256
    %vm48 = vmand %vm46, %vm47
    %49 = vst.msk [vmem:[#allocation7] ss:$4 sm:$0x3] %vm48, %v43
    %s50 = scalar_lea.vmem [#allocation7], 8
    %51 = vst.msk [vmem:[%s50] ss:$4 sm:$0x3] %vm48, %v44
    %v52 = vld [vmem:[#allocation5] sm:$0xf]
    %v53 = vld [vmem:[#allocation5 + $0x4] sm:$0xf]
    %v57 = vunpack.c.l.s4 1983009808
    %v58 = vunpack.c.0.s8 %v57
    %v59 = vlaneseq
    %v60 = vshrl.u32 %v59, 7
    %v61 = vsub.s32 %v58, %v60
    %v62 = vrot.slane %v52, %v61
    %v64 = vunpack.c.l.s4 1983009808
    %v65 = vunpack.c.0.s8 %v64
    %v66 = vlaneseq
    %v67 = vshrl.u32 %v66, 7
    %v68 = vsub.s32 %v65, %v67
    %v69 = vrot.slane %v53, %v68
    %v70 = vrot.slane %v62, 7
    %v71 = vrot.slane %v69, 7
    %74 = vst [vmem:[#allocation7] sm:$0x66] %v70
    %75 = vst [vmem:[#allocation7 + $0x8] sm:$0x66] %v71
    %v76 = vld [vmem:[%s2] sm:$0x3]
    %v77 = vld [vmem:[%s2 + $0x2] sm:$0x3]
    %s78 = scalar_lea.vmem [#allocation7], 3
    %79 = vst.msk [vmem:[%s78] ss:$4 sm:$0x3] %vm48, %v76
    %s80 = scalar_lea.vmem [#allocation7], 11
    %81 = vst.msk [vmem:[%s80] ss:$4 sm:$0x3] %vm48, %v77
    // Predicated region
    $region22: #{tpu_custom_call.1} parent=1 // pred_check
      _
    $region23: #{tpu_custom_call.1} parent=1 // pred_check_branch
      %83 = sbr.rel (0) target = $region25
    $region24: #{tpu_custom_call.1} parent=1 // pred_region
      %s85 = ssub.s32 256, 256
      %86 = vsyncadd [#allocation4], %s85
      %s87 = sshll.u32 [#allocation7], 4
      %s88 = int_to_ptr.vmem [resolvable:$true] %s87
      %93 = dma.vmem_to_hbm [thread:$0]  %s88, 256, %s3, [#allocation4], 128, 128, 8
    $region25: #{tpu_custom_call.1} parent=1 // pred_fallthru
      _
    // Predicated region
    $region26: #{tpu_custom_call.1} parent=1 // pred_check
      _
    $region27: #{tpu_custom_call.1} parent=1 // pred_check_branch
      %95 = sbr.rel (0) target = $region29
    $region28: #{tpu_custom_call.1} parent=1 // pred_region
      %96 = dma.done [#allocation4], 256
    $region29: #{tpu_custom_call.1} parent=1 // pred_fallthru
      _
    %97 = vsyncpa [#allocation3], 1
    %98 = vsyncpa [#allocation6], 1
    %99 = vsyncpa [#allocation4], 1

</llo_original>
